<compile_context>
chip_gen: v5e
topology: v5e:2x2
jax: 0.10.0
libtpu: 0.0.40
codegen_flags: <defaults>
</compile_context>

<pallas_src>
import functools

import jax
import jax.numpy as jnp
from jax.experimental import pallas as pl
from jax.experimental.pallas import tpu as pltpu


# Explicit scoped-VMEM budget: >= default on v5e (16 MiB) and == default on
# v6e/v7x (32 MiB); safe on v7x's 64 MiB physical VMEM.
_VMEM_LIMIT = 32 * 1024 * 1024

_LSTM_CHUNK = 8   # timesteps per grid step (static unroll depth)


def _fit(dim, tile, align):
    """Largest multiple of `align` that is <= tile and divides dim.

    Falls back to the full dim if dim is small or awkward (full-extent blocks
    are always legal)."""
    if dim <= tile:
        return dim
    for c in range(tile, align - 1, -align):
        if dim % c == 0:
            return c
    return dim


# ----------------------------------------------------------------------------
# Generic dense kernel:  out = x @ w + b
# Grid = (M-tiles, N-tiles, K-tiles); K is a reduction axis with an f32 VMEM
# accumulator (init on k==0, bias-add + cast + store on the last k).
# ----------------------------------------------------------------------------
def _dense_kernel(x_ref, w_ref, b_ref, o_ref, acc_ref):
    k = pl.program_id(2)

    @pl.when(k == 0)
    def _():
        acc_ref[...] = jnp.zeros_like(acc_ref)

    acc_ref[...] += jnp.dot(x_ref[...], w_ref[...],
                            preferred_element_type=jnp.float32)

    @pl.when(k == pl.num_programs(2) - 1)
    def _():
        o_ref[...] = (acc_ref[...] + b_ref[...]).astype(o_ref.dtype)


def _dense(x, w, b, *, out_dtype=jnp.float32, tm=256, tn=512, tk=512):
    """x: [M, K] (bf16), w: [K, N] (bf16), b: [1, N] f32 -> [M, N] out_dtype."""
    M, K = x.shape
    N = w.shape[1]
    tm = _fit(M, tm, 8)      # sublane-aligned row tile
    tn = _fit(N, tn, 128)    # lane-dense output tile (keep N a mult of 128 at scale)
    tk = _fit(K, tk, 128)    # bounded-K operand blocks (VMEM friendly)
    grid = (M // tm, N // tn, K // tk)
    return pl.pallas_call(
        _dense_kernel,
        out_shape=jax.ShapeDtypeStruct((M, N), out_dtype),
        grid_spec=pltpu.PrefetchScalarGridSpec(
            num_scalar_prefetch=0,
            grid=grid,
            in_specs=[
                pl.BlockSpec((tm, tk), lambda i, j, k: (i, k)),   # x rows / K slab
                pl.BlockSpec((tk, tn), lambda i, j, k: (k, j)),   # w K slab / cols
                pl.BlockSpec((1, tn), lambda i, j, k: (0, j)),    # bias slice (f32)
            ],
            out_specs=pl.BlockSpec((tm, tn), lambda i, j, k: (i, j)),
            scratch_shapes=[pltpu.VMEM((tm, tn), jnp.float32)],   # f32 accumulator
        ),
        compiler_params=pltpu.CompilerParams(
            dimension_semantics=("parallel", "parallel", "arbitrary"),
            vmem_limit_bytes=_VMEM_LIMIT),
    )(x, w, b)


# ----------------------------------------------------------------------------
# LSTM recurrence kernel.
# Grid = (batch blocks, time chunks); each grid step runs CHUNK timesteps.
# Only the truly sequential work lives here: h @ W_hh (bf16 MXU), the gate
# nonlinearities and the cell update (all f32 on the VPU/EUP).
# ----------------------------------------------------------------------------
def _lstm_kernel(xg_ref,      # [CHUNK, B_blk, 4H] bf16  (x @ W_ih + b), time-major
                 h0_ref,      # [B_blk, H] f32
                 c0_ref,      # [B_blk, H] f32
                 w_hh_hbm,    # [H, 4H] bf16  (HBM, memory_space=ANY)
                 h_all_ref,   # [B_blk, CHUNK, H] bf16   hidden states, batch-major
                 hN_ref,      # [B_blk, H] f32           final hidden state
                 cN_ref,      # [B_blk, H] f32           final cell state
                 h_sc,        # VMEM [B_blk, H] f32      carry
                 c_sc,        # VMEM [B_blk, H] f32      carry
                 w_sc,        # VMEM [H, 4H] bf16        weight-stationary W_hh
                 *, hidden_dim, chunk, seq_len):
    tc = pl.program_id(1)

    # Single-buffered, weight-stationary W_hh: DMA it into VMEM once per time
    # sweep (tc == 0) instead of letting BlockSpec double-buffer it every step.
    @pl.when(tc == 0)
    def _():
        pltpu.sync_copy(w_hh_hbm, w_sc)
        h_sc[...] = h0_ref[...]
        c_sc[...] = c0_ref[...]

    H = hidden_dim
    h = h_sc[...]
    c = c_sc[...]

    # Bounded static unroll over the chunk (depth == CHUNK, per review 4-8/16
    # keeps vreg live-ranges contained while hiding per-grid-step overhead).
    for s in range(chunk):
        step = tc * chunk + s
        gates = (xg_ref[s].astype(jnp.float32)
                 + jnp.dot(h.astype(jnp.bfloat16), w_sc[...],
                           preferred_element_type=jnp.float32))
        # PyTorch gate order (i, f, g, o).  Keep H a multiple of 128 at real
        # sizes so these slices stay lane-aligned.
        i_g = jax.nn.sigmoid(gates[:, 0 * H:1 * H])
        f_g = jax.nn.sigmoid(gates[:, 1 * H:2 * H])
        g_g = jnp.tanh(gates[:, 2 * H:3 * H])
        o_g = jax.nn.sigmoid(gates[:, 3 * H:4 * H])
        c = f_g * c + i_g * g_g
        h = o_g * jnp.tanh(c)

        # Batch-major store (static index -> cheap); padded steps past the true
        # sequence end write garbage rows that the wrapper slices off.
        h_all_ref[:, s, :] = h.astype(h_all_ref.dtype)

        # Capture the final state exactly at the true last timestep (robust to
        # time padding when T is not a multiple of CHUNK).
        @pl.when(step == seq_len - 1)
        def _():
            hN_ref[...] = h
            cN_ref[...] = c

    h_sc[...] = h
    c_sc[...] = c


# ----------------------------------------------------------------------------
# Forward pass (matches nn.Embedding -> nn.LSTM(batch_first) -> nn.Linear)
# ----------------------------------------------------------------------------
def decoder_forward(params, sequence, encoder_state):
    """sequence: int32 [B, T]; encoder_state: (h0, c0) each [1, B, H].

    Returns (logits [B, T, V] f32, (h_n [1, B, H], c_n [1, B, H]) f32)."""
    B, T = sequence.shape
    E = params["embedding"].shape[1]
    H = params["w_hh"].shape[0]
    V = params["w_out"].shape[1]

    # Cast MXU operands to bf16 once, outside the kernels (halves HBM->VMEM
    # traffic); biases and all elementwise math stay f32.
    emb_bf = params["embedding"].astype(jnp.bfloat16)     # [V, E]
    w_ih_bf = params["w_ih"].astype(jnp.bfloat16)         # [E, 4H]
    w_hh_bf = params["w_hh"].astype(jnp.bfloat16)         # [H, 4H]
    w_out_bf = params["w_out"].astype(jnp.bfloat16)       # [H, V]
    b = params["b"]                                       # [1, 4H] f32
    b_out = params["b_out"]                               # [1, V]  f32

    # 1) Embedding gather, produced directly time-major (no transpose of emb).
    emb_tm = jnp.take(emb_bf, sequence.T, axis=0)          # [T, B, E] bf16

    # 2) Input projection for all timesteps at once (parallel Pallas matmul).
    #    Bias (b_ih + b_hh) folded in here; output stored bf16 for the LSTM DMA.
    xg = _dense(emb_tm.reshape(T * B, E), w_ih_bf, b,
                out_dtype=jnp.bfloat16).reshape(T, B, 4 * H)

    # 3) Serial LSTM recurrence, chunked over time (and optionally over batch
    #    for v7x megacore when B keeps each half sublane-aligned).
    h0 = encoder_state[0][0].astype(jnp.float32)           # [B, H]
    c0 = encoder_state[1][0].astype(jnp.float32)           # [B, H]

    chunk = _LSTM_CHUNK
    t_pad = ((T + chunk - 1) // chunk) * chunk
    if t_pad != T:
        xg = jnp.pad(xg, ((0, t_pad - T), (0, 0), (0, 0)))
    nt = t_pad // chunk

    nb = 2 if (B % 16 == 0) else 1                         # batch split across TCs
    b_blk = B // nb

    kernel = functools.partial(_lstm_kernel, hidden_dim=H, chunk=chunk,
                               seq_len=T)

    h_all, h_n, c_n = pl.pallas_call(
        kernel,
        out_shape=(
            jax.ShapeDtypeStruct((B, t_pad, H), jnp.bfloat16),   # batch-major
            jax.ShapeDtypeStruct((B, H), jnp.float32),
            jax.ShapeDtypeStruct((B, H), jnp.float32),
        ),
        grid_spec=pltpu.PrefetchScalarGridSpec(
            num_scalar_prefetch=0,
            grid=(nb, nt),
            in_specs=[
                pl.BlockSpec((chunk, b_blk, 4 * H), lambda bb, tc: (tc, bb, 0)),
                pl.BlockSpec((b_blk, H), lambda bb, tc: (bb, 0)),        # h0
                pl.BlockSpec((b_blk, H), lambda bb, tc: (bb, 0)),        # c0
                pl.BlockSpec(memory_space=pl.ANY),                       # W_hh (HBM)
            ],
            out_specs=[
                pl.BlockSpec((b_blk, chunk, H), lambda bb, tc: (bb, tc, 0)),
                pl.BlockSpec((b_blk, H), lambda bb, tc: (bb, 0)),        # h_n
                pl.BlockSpec((b_blk, H), lambda bb, tc: (bb, 0)),        # c_n
            ],
            scratch_shapes=[
                pltpu.VMEM((b_blk, H), jnp.float32),        # h carry
                pltpu.VMEM((b_blk, H), jnp.float32),        # c carry
                pltpu.VMEM((H, 4 * H), jnp.bfloat16),       # weight-stationary W_hh
            ],
        ),
        compiler_params=pltpu.CompilerParams(
            dimension_semantics=("parallel", "arbitrary"),   # time is sequential
            vmem_limit_bytes=_VMEM_LIMIT),
    )(xg, h0, c0, w_hh_bf)

    if t_pad != T:
        h_all = h_all[:, :T, :]

    # 4) Vocab projection as one large parallel matmul; h_all is already
    #    batch-major so the reshape is free (no HBM transpose of any tensor).
    #    Keep V a multiple of 128 at real sizes for lane-dense logits stores.
    logits = _dense(h_all.reshape(B * T, H), w_out_bf, b_out,
                    out_dtype=jnp.float32).reshape(B, T, V)

    return logits, (h_n[None], c_n[None])


# ----------------------------------------------------------------------------
# Deterministic parameter initialization (synthetic, matches nn.Module shapes)
# ----------------------------------------------------------------------------
def init_params(key, vocab_size, embedding_dim, hidden_dim, padding_idx):
    ks = jax.random.split(key, 7)
    scale = 0.1
    embedding = scale * jax.random.normal(ks[0], (vocab_size, embedding_dim),
                                          jnp.float32)
    embedding = embedding.at[padding_idx].set(0.0)   # nn.Embedding padding_idx row

    # PyTorch LSTM gate order (i, f, g, o); weights stored transposed so the
    # kernels compute x @ W_ih and h @ W_hh.
    w_ih = scale * jax.random.normal(ks[1], (embedding_dim, 4 * hidden_dim),
                                     jnp.float32)
    w_hh = scale * jax.random.normal(ks[2], (hidden_dim, 4 * hidden_dim),
                                     jnp.float32)
    b_ih = scale * jax.random.normal(ks[3], (4 * hidden_dim,), jnp.float32)
    b_hh = scale * jax.random.normal(ks[4], (4 * hidden_dim,), jnp.float32)
    b = (b_ih + b_hh)[None, :]                         # [1, 4H]

    w_out = scale * jax.random.normal(ks[5], (hidden_dim, vocab_size),
                                      jnp.float32)
    b_out = scale * jax.random.normal(ks[6], (vocab_size,), jnp.float32)[None, :]

    return {"embedding": embedding, "w_ih": w_ih, "w_hh": w_hh, "b": b,
            "w_out": w_out, "b_out": b_out}


# ----------------------------------------------------------------------------
# Pure-JAX f32 reference (correctness sanity check)
# ----------------------------------------------------------------------------
def decoder_reference(params, sequence, encoder_state):
    emb = jnp.take(params["embedding"], sequence, axis=0)   # [B, T, E]
    h = encoder_state[0][0]
    c = encoder_state[1][0]
    H = h.shape[-1]
    outs = []
    for t in range(sequence.shape[1]):
        x = emb[:, t, :]
        gates = x @ params["w_ih"] + h @ params["w_hh"] + params["b"]
        i_g = jax.nn.sigmoid(gates[:, 0 * H:1 * H])
        f_g = jax.nn.sigmoid(gates[:, 1 * H:2 * H])
        g_g = jnp.tanh(gates[:, 2 * H:3 * H])
        o_g = jax.nn.sigmoid(gates[:, 3 * H:4 * H])
        c = f_g * c + i_g * g_g
        h = o_g * jnp.tanh(c)
        outs.append(h @ params["w_out"] + params["b_out"])
    logits = jnp.stack(outs, axis=1)
    return logits, (h[None], c[None])


if __name__ == "__main__":
    # Small, forward-consistent shapes.
    VOCAB, EMB, HID = 48, 16, 32
    B, T = 2, 8
    PADDING_IDX = 0   # TODO(synk): stands in for util.get_char2id()[' '] (not available).

    key = jax.random.PRNGKey(0)
    k_par, k_seq, k_h, k_c = jax.random.split(key, 4)

    params = init_params(k_par, VOCAB, EMB, HID, PADDING_IDX)
    sequence = jax.random.randint(k_seq, (B, T), 0, VOCAB, dtype=jnp.int32)
    h0 = 0.1 * jax.random.normal(k_h, (1, B, HID), jnp.float32)
    c0 = 0.1 * jax.random.normal(k_c, (1, B, HID), jnp.float32)

    logits, (h_n, c_n) = decoder_forward(params, sequence, (h0, c0))
    jax.block_until_ready((logits, h_n, c_n))

    # Sanity check against the pure-JAX f32 reference; tolerance accounts for
    # the bf16 MXU operands / bf16 intermediates in the Pallas path.
    ref_logits, (ref_h, ref_c) = decoder_reference(params, sequence, (h0, c0))
    assert logits.shape == (B, T, VOCAB)
    assert h_n.shape == (1, B, HID) and c_n.shape == (1, B, HID)
    assert jnp.allclose(logits, ref_logits, atol=2e-2, rtol=2e-2)
    assert jnp.allclose(h_n, ref_h, atol=1e-2, rtol=1e-2)
    assert jnp.allclose(c_n, ref_c, atol=1e-2, rtol=1e-2)

    print("KERNEL_OK")
</pallas_src>

<mosaic_0001>
module attributes {stable_mosaic.version = 11 : i64} {
  func.func @_dense_kernel(%arg0: i32, %arg1: i32, %arg2: i32, %arg3: memref<16x16xbf16, #tpu.memory_space<vmem>>, %arg4: memref<16x128xbf16, #tpu.memory_space<vmem>>, %arg5: memref<1x128xf32, #tpu.memory_space<vmem>>, %arg6: memref<16x128xbf16, #tpu.memory_space<vmem>>, %arg7: memref<16x128xf32, #tpu.memory_space<vmem>>) attributes {dimension_semantics = [#tpu.dimension_semantics<parallel>, #tpu.dimension_semantics<parallel>, #tpu.dimension_semantics<arbitrary>], iteration_bounds = array<i64: 1, 1, 1>, scalar_prefetch = 0 : i64, scratch_operands = 1 : i64, tpu.core_type = #tpu.core_type<tc>, window_params = [{transform_indices = @transform_0, window_bounds = array<i64: 16, 16>}, {transform_indices = @transform_1, window_bounds = array<i64: 16, 128>}, {transform_indices = @transform_2, window_bounds = array<i64: 1, 128>}, {transform_indices = @transform_3, window_bounds = array<i64: 16, 128>}]} {
    %c0_i32 = arith.constant 0 : i32
    %0 = arith.cmpi eq, %arg2, %c0_i32 : i32
    %1 = arith.extui %0 : i1 to i32
    %c0_i32_0 = arith.constant 0 : i32
    %2 = arith.cmpi ne, %1, %c0_i32_0 : i32
    scf.if %2 {
      %cst_10 = arith.constant 0.000000e+00 : f32
      %12 = vector.broadcast %cst_10 : f32 to vector<16x128xf32>
      %c0_11 = arith.constant 0 : index
      %c0_12 = arith.constant 0 : index
      %13 = vector.load %arg7[%c0_11, %c0_12] : memref<16x128xf32, #tpu.memory_space<vmem>>, vector<16x128xf32>
      tpu.vector_store %arg7[%c0_11, %c0_12], %12 {strides = array<i32>} : memref<16x128xf32, #tpu.memory_space<vmem>>, vector<16x128xf32>,
    } else {
    }
    %c0 = arith.constant 0 : index
    %c0_1 = arith.constant 0 : index
    %3 = vector.load %arg7[%c0, %c0_1] : memref<16x128xf32, #tpu.memory_space<vmem>>, vector<16x128xf32>
    %c0_2 = arith.constant 0 : index
    %c0_3 = arith.constant 0 : index
    %4 = vector.load %arg3[%c0_2, %c0_3] : memref<16x16xbf16, #tpu.memory_space<vmem>>, vector<16x16xbf16>
    %c0_4 = arith.constant 0 : index
    %c0_5 = arith.constant 0 : index
    %5 = vector.load %arg4[%c0_4, %c0_5] : memref<16x128xbf16, #tpu.memory_space<vmem>>, vector<16x128xbf16>
    %cst = arith.constant dense<0.000000e+00> : vector<16x128xf32>
    %6 = tpu.matmul %4, %5, %cst {dimension_numbers = #tpu.dot_dimension_numbers<[1], [0], [0], [1], [0, 0, 1, 1], [], []>} : vector<16x16xbf16>, vector<16x128xbf16>, vector<16x128xf32> -> vector<16x128xf32>
    %7 = arith.addf %3, %6 : vector<16x128xf32>
    %c0_6 = arith.constant 0 : index
    %c0_7 = arith.constant 0 : index
    %8 = vector.load %arg7[%c0_6, %c0_7] : memref<16x128xf32, #tpu.memory_space<vmem>>, vector<16x128xf32>
    tpu.vector_store %arg7[%c0_6, %c0_7], %7 {strides = array<i32>} : memref<16x128xf32, #tpu.memory_space<vmem>>, vector<16x128xf32>,
    %c0_i32_8 = arith.constant 0 : i32
    %9 = arith.cmpi eq, %arg2, %c0_i32_8 : i32
    %10 = arith.extui %9 : i1 to i32
    %c0_i32_9 = arith.constant 0 : i32
    %11 = arith.cmpi ne, %10, %c0_i32_9 : i32
    scf.if %11 {
      %c0_10 = arith.constant 0 : index
      %c0_11 = arith.constant 0 : index
      %12 = vector.load %arg7[%c0_10, %c0_11] : memref<16x128xf32, #tpu.memory_space<vmem>>, vector<16x128xf32>
      %c0_12 = arith.constant 0 : index
      %c0_13 = arith.constant 0 : index
      %13 = vector.load %arg5[%c0_12, %c0_13] : memref<1x128xf32, #tpu.memory_space<vmem>>, vector<1x128xf32>
      %14 = vector.broadcast %13 : vector<1x128xf32> to vector<16x128xf32>
      %15 = arith.addf %12, %14 : vector<16x128xf32>
      %16 = arith.truncf %15 : vector<16x128xf32> to vector<16x128xbf16>
      %c0_14 = arith.constant 0 : index
      %c0_15 = arith.constant 0 : index
      %17 = vector.load %arg6[%c0_14, %c0_15] : memref<16x128xbf16, #tpu.memory_space<vmem>>, vector<16x128xbf16>
      tpu.vector_store %arg6[%c0_14, %c0_15], %16 {strides = array<i32>} : memref<16x128xbf16, #tpu.memory_space<vmem>>, vector<16x128xbf16>,
    } else {
    }
    return
  }
  func.func @transform_0(%arg0: i32, %arg1: i32, %arg2: i32) -> (i32, i32) {
    %c0_i32 = arith.constant 0 : i32
    return %arg0, %arg2 : i32, i32
  }
  func.func @transform_1(%arg0: i32, %arg1: i32, %arg2: i32) -> (i32, i32) {
    %c0_i32 = arith.constant 0 : i32
    return %arg2, %arg1 : i32, i32
  }
  func.func @transform_2(%arg0: i32, %arg1: i32, %arg2: i32) -> (i32, i32) {
    %c0_i32 = arith.constant 0 : i32
    %c0_i32_0 = arith.constant 0 : i32
    return %c0_i32, %arg1 : i32, i32
  }
  func.func @transform_3(%arg0: i32, %arg1: i32, %arg2: i32) -> (i32, i32) {
    %c0_i32 = arith.constant 0 : i32
    return %arg0, %arg1 : i32, i32
  }
}

</mosaic_0001>

<llo_original>
// kernel: tpu_custom_call.1
$region0: #{tpu_custom_call.1}
  #allocation0 [shape = 'u32[]', space=smem, size = 0x4, offset = 0x4, fixed_abs, tag = 'smem constant byte address 0x4 - core index']
  #allocation1 [shape = 'u32[72,128]{1,0:T(1,128)}', space=vmem, size = 0x9000, scoped, tag = 'internal scratch']
  #allocation2 [shape = 'f32[16,128]{1,0:T(8,128)}', space=vmem, size = 0x2000, scoped, tag = 'scratch operand']
  %s0 = inlined_call_operand.hbm [shape: bf16[16,16], index: 0, kind: input, shape index: {}]
  %s1 = inlined_call_operand.hbm [shape: bf16[16,128], index: 1, kind: input, shape index: {}]
  %s2 = inlined_call_operand.vmem [shape: f32[1,128], index: 2, kind: input, shape index: {}]
  %s3 = inlined_call_operand.hbm [shape: bf16[16,128], index: 3, kind: output, shape index: {}]
  %s4 = sld [smem:[#allocation0]]
  $region38: #{tpu_custom_call.1} parent=0
    _
  %s6 = ssub.s32 1, %s4
  %s7 = scalar_select 0, %s6, %s4
  $region1: #{tpu_custom_call.1} parent=0
    #allocation3 [shape = 'u8[4096]{0}', space=vmem, size = 0x1000, scoped, tag = 'input window, operand 0, single buffered']
    #allocation4 [shape = 's32[1]{0}', space=sflag, size = 0x4, scoped, tag = 'scoped memory for tpu_custom_call.1']
    #allocation5 [shape = 's32[1]{0}', space=sflag, size = 0x4, scoped, tag = 'scoped memory for tpu_custom_call.1']
    #allocation6 [shape = 'u8[4096]{0}', space=vmem, size = 0x1000, scoped, tag = 'input window, operand 1, single buffered']
    #allocation7 [shape = 's32[1]{0}', space=sflag, size = 0x4, scoped, tag = 'scoped memory for tpu_custom_call.1']
    #allocation8 [shape = 'u8[4096]{0}', space=vmem, size = 0x1000, scoped, tag = 'output window, operand 0, single buffered']
    %8 = vsyncpa [#allocation4], 0
    %9 = vsyncpa [#allocation7], 0
    %10 = vsyncpa [#allocation5], 0
    // Predicated region
    $region2: #{tpu_custom_call.1} parent=1 // pred_check
      _
    $region3: #{tpu_custom_call.1} parent=1 // pred_check_branch
      %12 = sbr.rel (0) target = $region5
    $region4: #{tpu_custom_call.1} parent=1 // pred_region
      %14 = vsyncadd [#allocation4], 0
      %s15 = sshll.u32 %s0, 4
      %s16 = int_to_ptr.hbm [resolvable:$true] %s15
      %s17 = sshll.u32 [#allocation3], 4
      %s18 = int_to_ptr.vmem [resolvable:$true] %s17
      %23 = dma.hbm_to_vmem [thread:$0]  %s16, 128, %s18, [#allocation4], 64, 64, 4
    $region5: #{tpu_custom_call.1} parent=1 // pred_fallthru
      _
    // Predicated region
    $region6: #{tpu_custom_call.1} parent=1 // pred_check
      _
    $region7: #{tpu_custom_call.1} parent=1 // pred_check_branch
      %25 = sbr.rel (0) target = $region9
    $region8: #{tpu_custom_call.1} parent=1 // pred_region
      %27 = vsyncadd [#allocation7], 0
      %s28 = sshll.u32 %s1, 4
      %s29 = int_to_ptr.hbm [resolvable:$true] %s28
      %s30 = sshll.u32 [#allocation6], 4
      %s31 = int_to_ptr.vmem [resolvable:$true] %s30
      %36 = dma.hbm_to_vmem [thread:$0]  %s29, 128, %s31, [#allocation7], 64, 64, 4
    $region9: #{tpu_custom_call.1} parent=1 // pred_fallthru
      _
    // Predicated region
    $region10: #{tpu_custom_call.1} parent=1 // pred_check
      _
    $region11: #{tpu_custom_call.1} parent=1 // pred_check_branch
      %38 = sbr.rel (0) target = $region13
    $region12: #{tpu_custom_call.1} parent=1 // pred_region
      _
    $region13: #{tpu_custom_call.1} parent=1 // pred_fallthru
      _
    // Predicated region
    $region14: #{tpu_custom_call.1} parent=1 // pred_check
      _
    $region15: #{tpu_custom_call.1} parent=1 // pred_check_branch
      %40 = sbr.rel (0) target = $region17
    $region16: #{tpu_custom_call.1} parent=1 // pred_region
      %42 = dma.done [#allocation4], 128
    $region17: #{tpu_custom_call.1} parent=1 // pred_fallthru
      _
    // Predicated region
    $region18: #{tpu_custom_call.1} parent=1 // pred_check
      _
    $region19: #{tpu_custom_call.1} parent=1 // pred_check_branch
      %44 = sbr.rel (0) target = $region21
    $region20: #{tpu_custom_call.1} parent=1 // pred_region
      %46 = dma.done [#allocation7], 128
    $region21: #{tpu_custom_call.1} parent=1 // pred_fallthru
      _
    %p48 = scmp.eq.s32.totalorder 0, 0
    // Predicated region
    $region22: #{tpu_custom_call.1} parent=1 // pred_check
      %p49 = pneg %p48
    $region23: #{tpu_custom_call.1} parent=1 // pred_check_branch
      %51 = sbr.rel (%p49) target = $region25
    $region24: #{tpu_custom_call.1} parent=1 // pred_region
      %52 = vst [vmem:[#allocation2] sm:$0xff] 0.0
      %53 = vst [vmem:[#allocation2 + $0x8] sm:$0xff] 0.0
    $region25: #{tpu_custom_call.1} parent=1 // pred_fallthru
      _
    %v54 = vld [vmem:[#allocation2] sm:$0xff]
    %v55 = vld [vmem:[#allocation2 + $0x8] sm:$0xff]
    %v56 = vld [vmem:[#allocation3] sm:$0xf]
    %v57 = vld [vmem:[#allocation3 + $0x4] sm:$0xf]
    %v58 = vld [vmem:[#allocation6] sm:$0xf]
    %v59 = vld [vmem:[#allocation6 + $0x4] sm:$0xf]
    %v62 = vunpack.c.l.b16 %v56
    %v63 = vunpack.c.l.b16 %v57
    %v64 = vpack.c.b16 %v63, %v62
    %v67 = vunpack.c.l.b16 %v58
    %v68 = vunpack.c.l.b16 %v59
    %v69 = vpack.c.b16 %v68, %v67
    %vm71 = vcmask 130048
    %v73 = vsel %vm71, %v64, 0
    %75 = vmatpush.bf16.msra.mxu0 0
    %76 = vmatpush.bf16.msra.mxu0 0
    %77 = vmatpush.bf16.msra.mxu0 0
    %78 = vmatpush.bf16.msra.mxu0 0
    %79 = vmatpush.bf16.msra.mxu0 0
    %80 = vmatpush.bf16.msra.mxu0 0
    %81 = vmatpush.bf16.msra.mxu0 0
    %82 = vmatpush.bf16.msra.mxu0 %v69
    %83 = vmatmul.bf16.gmra.mxu0 %v73
    %v84 = vpop.f32.mrf.mxu0
    %v85 = vadd.f32 0.0, %v84
    %v86 = vpop.f32.mrf.mxu0
    %v87 = vadd.f32 0.0, %v86
    %88 = vdwg.mxu0
    %v89 = vadd.f32 %v54, %v85
    %v90 = vadd.f32 %v55, %v87
    %91 = vst [vmem:[#allocation2] sm:$0xff] %v89
    %92 = vst [vmem:[#allocation2 + $0x8] sm:$0xff] %v90
    // Predicated region
    $region26: #{tpu_custom_call.1} parent=1 // pred_check
      %p93 = pneg %p48
    $region27: #{tpu_custom_call.1} parent=1 // pred_check_branch
      %95 = sbr.rel (%p93) target = $region29
    $region28: #{tpu_custom_call.1} parent=1 // pred_region
      %v96 = vld [vmem:[#allocation2] sm:$0xff]
      %v97 = vld [vmem:[#allocation2 + $0x8] sm:$0xff]
      %v98 = vld [vmem:[%s2] sm:$0x1]
      %v100 = vperm.slane %v98, 0
      %v102 = vadd.f32 %v96, %v100
      %v103 = vadd.f32 %v97, %v100
      %v104 = vpack.c.bf16 %v102, %v102
      %v105 = vpack.c.bf16 %v103, %v103
      %106 = vst [vmem:[#allocation8] sm:$0xf] %v104
      %107 = vst [vmem:[#allocation8 + $0x4] sm:$0xf] %v105
    $region29: #{tpu_custom_call.1} parent=1 // pred_fallthru
      _
    // Predicated region
    $region30: #{tpu_custom_call.1} parent=1 // pred_check
      _
    $region31: #{tpu_custom_call.1} parent=1 // pred_check_branch
      %109 = sbr.rel (0) target = $region33
    $region32: #{tpu_custom_call.1} parent=1 // pred_region
      %111 = vsyncadd [#allocation5], 0
      %s112 = sshll.u32 [#allocation8], 4
      %s113 = int_to_ptr.vmem [resolvable:$true] %s112
      %s114 = sshll.u32 %s3, 4
      %s115 = int_to_ptr.hbm [resolvable:$true] %s114
      %120 = dma.vmem_to_hbm [thread:$0]  %s113, 128, %s115, [#allocation5], 64, 64, 4
    $region33: #{tpu_custom_call.1} parent=1 // pred_fallthru
      _
    // Predicated region
    $region34: #{tpu_custom_call.1} parent=1 // pred_check
      _
    $region35: #{tpu_custom_call.1} parent=1 // pred_check_branch
      %122 = sbr.rel (0) target = $region37
    $region36: #{tpu_custom_call.1} parent=1 // pred_region
      %124 = dma.done [#allocation5], 128
    $region37: #{tpu_custom_call.1} parent=1 // pred_fallthru
      _
    %125 = vsyncpa [#allocation4], 1
    %126 = vsyncpa [#allocation7], 1
    %127 = vsyncpa [#allocation5], 1

</llo_original>
